<compile_context>
chip_gen: v5e
topology: v5e:2x2
jax: 0.10.0
libtpu: 0.0.40
codegen_flags: <defaults>
</compile_context>

<pallas_src>
import functools

import jax
import jax.numpy as jnp
from jax import lax
from jax.experimental import pallas as pl
from jax.experimental.pallas import tpu as pltpu

LAMBDA_TRANS = 0.1
LAMBDA_CLASS = 0.1
LAMBDA_CONTEXT = 0.1

_LANES = 128


def _round_up(x, m):
    return ((x + m - 1) // m) * m


def _cdiv(a, b):
    return (a + b - 1) // b


def _mse_lane_partial(p_ref, t_ref, local_tile, tile_rows, valid_rows, needs_mask):
    """Per-lane partial sum of squared error for one tile; (1, 128) f32."""
    p = p_ref[...].astype(jnp.float32)
    t = t_ref[...].astype(jnp.float32)
    d = p - t
    sq = d * d
    if needs_mask:  # only the segment's ragged last tile can read OOB garbage
        row = local_tile * tile_rows + lax.broadcasted_iota(jnp.int32, sq.shape, 0)
        sq = jnp.where(row < valid_rows, sq, 0.0)
    return jnp.sum(sq, axis=0, keepdims=True)


def _bce_lane_partial(p_ref, t_ref, local_tile, tile_rows, valid_rows, needs_mask):
    """Per-lane partial sum of BCE for one tile; (1, 128) f32."""
    # TODO(synk): if the producer ever hands pre-sigmoid logits (or guarantees
    # binary targets), switch to the one-log BCEWithLogits / -log(select) form
    # to halve EUP work (matters on v7x where BCE tiles become EUP-bound).
    p = p_ref[...].astype(jnp.float32)
    t = t_ref[...].astype(jnp.float32)
    logp = jnp.maximum(jnp.log(p), -100.0)          # PyTorch BCELoss clamp
    log1mp = jnp.maximum(jnp.log(1.0 - p), -100.0)
    elem = -(t * logp + (1.0 - t) * log1mp)
    if needs_mask:
        row = local_tile * tile_rows + lax.broadcasted_iota(jnp.int32, elem.shape, 0)
        elem = jnp.where(row < valid_rows, elem, 0.0)
    return jnp.sum(elem, axis=0, keepdims=True)


def _loss_kernel(pt_ref, tt_ref, pc_ref, tc_ref, px_ref, tx_ref,
                 logits_ref, cls_ref, out_ref, *,
                 nt_t, tile_t, rows_t,
                 nt_c, tile_c, rows_c,
                 nt_x, tile_x, rows_x):
    pid = pl.program_id(0)
    ce_pid = nt_t + nt_c + nt_x

    # --- traffic MSE tiles -------------------------------------------------
    @pl.when(pid < nt_t)
    def _():
        out_ref[...] = _mse_lane_partial(
            pt_ref, tt_ref, pid, tile_t, rows_t, rows_t % tile_t != 0)[None]

    # --- context MSE tiles -------------------------------------------------
    @pl.when(jnp.logical_and(pid >= nt_t, pid < nt_t + nt_c))
    def _():
        out_ref[...] = _mse_lane_partial(
            pc_ref, tc_ref, pid - nt_t, tile_c, rows_c,
            rows_c % tile_c != 0)[None]

    # --- transmission BCE tiles --------------------------------------------
    @pl.when(jnp.logical_and(pid >= nt_t + nt_c, pid < ce_pid))
    def _():
        out_ref[...] = _bce_lane_partial(
            px_ref, tx_ref, pid - nt_t - nt_c, tile_x, rows_x,
            rows_x % tile_x != 0)[None]

    # --- cross entropy (small, VMEM-resident logits) -----------------------
    @pl.when(pid == ce_pid)
    def _():
        logits = logits_ref[...].astype(jnp.float32)
        m = jnp.max(logits, axis=-1, keepdims=True)
        lse = m + jnp.log(jnp.sum(jnp.exp(logits - m), axis=-1, keepdims=True))
        col = lax.broadcasted_iota(jnp.int32, logits.shape, 1)
        picked = jnp.sum(jnp.where(col == cls_ref[...], logits, 0.0),
                         axis=-1, keepdims=True)
        ce_sum = jnp.sum(lse - picked)
        lane = lax.broadcasted_iota(jnp.int32, (1, 1, _LANES), 2)
        out_ref[...] = jnp.where(lane == 0, ce_sum, 0.0)


def _pack_lane_dense(x, pad_value, sublane_mult):
    """Flatten x to a lane-dense (rows, 128) view.

    Only the ragged tail (<128 elems) and the sublane remainder are padded
    with a loss-neutral value, so no full-tile / inter-segment padding and no
    slab concatenation is ever materialized.
    """
    flat = jnp.ravel(x)
    n = flat.shape[0]
    rows = max(_round_up(_cdiv(n, _LANES), sublane_mult), sublane_mult)
    pad = rows * _LANES - n
    if pad:
        flat = jnp.pad(flat, (0, pad), constant_values=pad_value)
    return flat.reshape(rows, _LANES), rows


def custom_loss(outputs_traffic, traffics,
                outputs_traffic_class, traffic_class,
                outputs_transmissions, transmissions,
                outputs_context, context,
                tile_rows=2048):
    n_traffic = outputs_traffic.size
    n_ctx = outputs_context.size
    n_trans = outputs_transmissions.size
    n_batch, n_classes = outputs_traffic_class.shape
    assert min(n_traffic, n_ctx, n_trans, n_batch) > 0, "empty loss term"

    def seg_mult(a, b):
        # packed sub-32-bit dtypes want 16/32-row sublane multiples
        it = min(jnp.dtype(a.dtype).itemsize, jnp.dtype(b.dtype).itemsize)
        return max(8, 32 // it)

    m_t = seg_mult(outputs_traffic, traffics)
    m_c = seg_mult(outputs_context, context)
    m_x = seg_mult(outputs_transmissions, transmissions)

    # Lane-dense views; pads are loss-neutral (MSE: 0 diff, BCE: p=t=1 -> 0).
    pt, rows_t = _pack_lane_dense(outputs_traffic, 0, m_t)
    tt, _ = _pack_lane_dense(traffics, 0, m_t)
    pc, rows_c = _pack_lane_dense(outputs_context, 0, m_c)
    tc, _ = _pack_lane_dense(context, 0, m_c)
    px, rows_x = _pack_lane_dense(outputs_transmissions, 1, m_x)
    tx, _ = _pack_lane_dense(transmissions, 1, m_x)

    # Per-segment tile rows (multiple of the segment's sublane quantum, capped
    # at the segment size so small terms stay single-tile / low-VMEM).
    tile_t = min(_round_up(tile_rows, m_t), rows_t)
    tile_c = min(_round_up(tile_rows, m_c), rows_c)
    tile_x = min(_round_up(tile_rows, m_x), rows_x)

    nt_t = _cdiv(rows_t, tile_t)
    nt_c = _cdiv(rows_c, tile_c)
    nt_x = _cdiv(rows_x, tile_x)
    n_tiles = nt_t + nt_c + nt_x + 1           # +1: cross-entropy tile

    cls = traffic_class.astype(jnp.int32).reshape(n_batch, 1)
    logits_bytes = n_batch * n_classes * jnp.dtype(outputs_traffic_class.dtype).itemsize
    # VMEM-resident class head guard (it is double-buffered every step).
    assert logits_bytes <= 4 * 1024 * 1024, (
        "class-logit block is VMEM-resident; tile CE over the batch for large heads")
    # TODO(synk): for very large class heads, give CE its own batch-tiled grid
    # segment instead of a constant-index resident block.

    kernel = functools.partial(
        _loss_kernel,
        nt_t=nt_t, tile_t=tile_t, rows_t=rows_t,
        nt_c=nt_c, tile_c=tile_c, rows_c=rows_c,
        nt_x=nt_x, tile_x=tile_x, rows_x=rows_x,
    )

    def seg_map(offset, n_blocks):
        def imap(i):
            j = jnp.minimum(jnp.maximum(i - offset, 0), n_blocks - 1)
            return (j, 0)
        return imap

    in_specs = [
        pl.BlockSpec((tile_t, _LANES), seg_map(0, nt_t)),
        pl.BlockSpec((tile_t, _LANES), seg_map(0, nt_t)),
        pl.BlockSpec((tile_c, _LANES), seg_map(nt_t, nt_c)),
        pl.BlockSpec((tile_c, _LANES), seg_map(nt_t, nt_c)),
        pl.BlockSpec((tile_x, _LANES), seg_map(nt_t + nt_c, nt_x)),
        pl.BlockSpec((tile_x, _LANES), seg_map(nt_t + nt_c, nt_x)),
        pl.BlockSpec((n_batch, n_classes), lambda i: (0, 0)),
        pl.BlockSpec((n_batch, 1), lambda i: (0, 0)),
    ]

    # Bytes / flops hint for XLA's scheduler.
    seg_bytes = sum(a.size * a.dtype.itemsize for a in (pt, tt, pc, tc, px, tx))
    cost = pl.CostEstimate(
        flops=3 * (n_traffic + n_ctx) + 9 * n_trans + 6 * n_batch * n_classes,
        transcendentals=2 * rows_x * _LANES + n_batch * (n_classes + 1),
        bytes_accessed=seg_bytes + logits_bytes + n_batch * 4 + n_tiles * _LANES * 4,
    )

    # Double-buffered per-block VMEM footprint (+ resident logits) with slack.
    blk_bytes = 0
    for tile, a, b in ((tile_t, pt, tt), (tile_c, pc, tc), (tile_x, px, tx)):
        blk_bytes += 2 * tile * _LANES * (a.dtype.itemsize + b.dtype.itemsize)
    vmem_limit = int(min(64 << 20,
                         max(16 << 20, blk_bytes + 4 * logits_bytes + (2 << 20))))

    partials = pl.pallas_call(
        kernel,
        out_shape=jax.ShapeDtypeStruct((n_tiles, 1, _LANES), jnp.float32),
        grid=(n_tiles,),
        in_specs=in_specs,
        out_specs=pl.BlockSpec((1, 1, _LANES), lambda i: (i, 0, 0)),
        compiler_params=pltpu.CompilerParams(
            dimension_semantics=("parallel",),
            vmem_limit_bytes=vmem_limit,
        ),
        cost_estimate=cost,
    )(pt, tt, pc, tc, px, tx, outputs_traffic_class, cls)

    # Tiny final reduction + scaling in the wrapper (per-segment 1/N and λ).
    per_tile = jnp.sum(partials[:, 0, :], axis=-1)        # (n_tiles,)
    s_traffic = jnp.sum(per_tile[:nt_t])
    s_ctx = jnp.sum(per_tile[nt_t:nt_t + nt_c])
    s_trans = jnp.sum(per_tile[nt_t + nt_c:nt_t + nt_c + nt_x])
    ce_sum = per_tile[-1]

    mse = s_traffic / n_traffic
    total = (mse
             + LAMBDA_CLASS * (ce_sum / n_batch)
             + LAMBDA_TRANS * (s_trans / n_trans)
             + LAMBDA_CONTEXT * (s_ctx / n_ctx))
    return total, mse


def _reference(outputs_traffic, traffics,
               outputs_traffic_class, traffic_class,
               outputs_transmissions, transmissions,
               outputs_context, context):
    mse_loss = jnp.mean((outputs_traffic - traffics) ** 2)
    logp = jax.nn.log_softmax(outputs_traffic_class, axis=-1)
    ce_loss = -jnp.mean(jnp.take_along_axis(
        logp, traffic_class.astype(jnp.int32)[:, None], axis=-1))
    p = outputs_transmissions
    bce_loss = jnp.mean(-(transmissions * jnp.maximum(jnp.log(p), -100.0)
                          + (1.0 - transmissions)
                          * jnp.maximum(jnp.log(1.0 - p), -100.0)))
    mse_ctx = jnp.mean((outputs_context - context) ** 2)
    total = (mse_loss + LAMBDA_CLASS * ce_loss + LAMBDA_TRANS * bce_loss
             + LAMBDA_CONTEXT * mse_ctx)
    return total, mse_loss


if __name__ == "__main__":
    key = jax.random.PRNGKey(0)

    def make_case(case_key, n, f_traffic, c, f_trans, f_ctx):
        ks = jax.random.split(case_key, 8)
        outputs_traffic = jax.random.normal(ks[0], (n, f_traffic), jnp.float32)
        traffics = jax.random.normal(ks[1], (n, f_traffic), jnp.float32)
        outputs_traffic_class = jax.random.normal(ks[2], (n, c), jnp.float32)
        traffic_class = jax.random.randint(ks[3], (n,), 0, c, jnp.int32)
        outputs_transmissions = jax.nn.sigmoid(
            jax.random.normal(ks[4], (n, f_trans), jnp.float32))
        transmissions = jax.random.bernoulli(
            ks[5], 0.5, (n, f_trans)).astype(jnp.float32)
        outputs_context = jax.random.normal(ks[6], (n, f_ctx), jnp.float32)
        context = jax.random.normal(ks[7], (n, f_ctx), jnp.float32)
        return (outputs_traffic, traffics, outputs_traffic_class, traffic_class,
                outputs_transmissions, transmissions, outputs_context, context)

    loss_fn = jax.jit(custom_loss, static_argnames=("tile_rows",))

    k1, k2, k3 = jax.random.split(key, 3)
    cases = [
        (make_case(k1, 8, 16, 8, 16, 32), {}),                    # lane-aligned
        (make_case(k2, 4, 10, 5, 7, 33), {}),                     # ragged tails
        (make_case(k3, 65, 40, 7, 30, 50), dict(tile_rows=16)),   # multi-tile + mask
    ]
    for args, kw in cases:
        total, mse = loss_fn(*args, **kw)
        jax.block_until_ready((total, mse))
        ref_total, ref_mse = _reference(*args)
        assert jnp.allclose(total, ref_total, atol=1e-5, rtol=1e-5), (total, ref_total)
        assert jnp.allclose(mse, ref_mse, atol=1e-5, rtol=1e-5), (mse, ref_mse)

    print("KERNEL_OK")
</pallas_src>

<mosaic_0001>
module attributes {stable_mosaic.version = 11 : i64} {
  func.func @_loss_kernel(%arg0: i32, %arg1: memref<8x128xf32, #tpu.memory_space<vmem>>, %arg2: memref<8x128xf32, #tpu.memory_space<vmem>>, %arg3: memref<8x128xf32, #tpu.memory_space<vmem>>, %arg4: memref<8x128xf32, #tpu.memory_space<vmem>>, %arg5: memref<8x128xf32, #tpu.memory_space<vmem>>, %arg6: memref<8x128xf32, #tpu.memory_space<vmem>>, %arg7: memref<8x8xf32, #tpu.memory_space<vmem>>, %arg8: memref<8x1xi32, #tpu.memory_space<vmem>>, %arg9: memref<1x1x128xf32, #tpu.memory_space<vmem>>) attributes {dimension_semantics = [#tpu.dimension_semantics<parallel>], iteration_bounds = array<i64: 4>, scalar_prefetch = 0 : i64, scratch_operands = 0 : i64, tpu.core_type = #tpu.core_type<tc>, window_params = [{transform_indices = @transform_0, window_bounds = array<i64: 8, 128>}, {transform_indices = @transform_1, window_bounds = array<i64: 8, 128>}, {transform_indices = @transform_2, window_bounds = array<i64: 8, 128>}, {transform_indices = @transform_3, window_bounds = array<i64: 8, 128>}, {transform_indices = @transform_4, window_bounds = array<i64: 8, 128>}, {transform_indices = @transform_5, window_bounds = array<i64: 8, 128>}, {pipeline_mode = #tpu.pipeline_mode<synchronous>, transform_indices = @transform_6, window_bounds = array<i64: 8, 8>}, {pipeline_mode = #tpu.pipeline_mode<synchronous>, transform_indices = @transform_7, window_bounds = array<i64: 8, 1>}, {transform_indices = @transform_8, window_bounds = array<i64: 1, 1, 128>}]} {
    %c1_i32 = arith.constant 1 : i32
    %0 = arith.cmpi slt, %arg0, %c1_i32 : i32
    %1 = arith.extui %0 : i1 to i32
    %c0_i32 = arith.constant 0 : i32
    %2 = arith.cmpi ne, %1, %c0_i32 : i32
    scf.if %2 {
      %c0 = arith.constant 0 : index
      %c0_6 = arith.constant 0 : index
      %16 = vector.load %arg1[%c0, %c0_6] : memref<8x128xf32, #tpu.memory_space<vmem>>, vector<8x128xf32>
      %c0_7 = arith.constant 0 : index
      %c0_8 = arith.constant 0 : index
      %17 = vector.load %arg2[%c0_7, %c0_8] : memref<8x128xf32, #tpu.memory_space<vmem>>, vector<8x128xf32>
      %18 = arith.subf %16, %17 : vector<8x128xf32>
      %19 = arith.mulf %18, %18 : vector<8x128xf32>
      %cst = arith.constant dense<0.000000e+00> : vector<128xf32>
      %20 = vector.multi_reduction <add>, %19, %cst [0] : vector<8x128xf32> to vector<128xf32>
      %21 = vector.shape_cast %20 : vector<128xf32> to vector<1x128xf32>
      %22 = vector.shape_cast %21 : vector<1x128xf32> to vector<1x1x128xf32>
      %c0_9 = arith.constant 0 : index
      %c0_10 = arith.constant 0 : index
      %c0_11 = arith.constant 0 : index
      %23 = vector.load %arg9[%c0_9, %c0_10, %c0_11] : memref<1x1x128xf32, #tpu.memory_space<vmem>>, vector<1x1x128xf32>
      tpu.vector_store %arg9[%c0_9, %c0_10, %c0_11], %22 {strides = array<i32>} : memref<1x1x128xf32, #tpu.memory_space<vmem>>, vector<1x1x128xf32>,
    } else {
    }
    %c1_i32_0 = arith.constant 1 : i32
    %3 = arith.cmpi sge, %arg0, %c1_i32_0 : i32
    %c2_i32 = arith.constant 2 : i32
    %4 = arith.cmpi slt, %arg0, %c2_i32 : i32
    %5 = arith.andi %3, %4 : i1
    %6 = arith.extui %5 : i1 to i32
    %c0_i32_1 = arith.constant 0 : i32
    %7 = arith.cmpi ne, %6, %c0_i32_1 : i32
    scf.if %7 {
      %c0 = arith.constant 0 : index
      %c0_6 = arith.constant 0 : index
      %16 = vector.load %arg3[%c0, %c0_6] : memref<8x128xf32, #tpu.memory_space<vmem>>, vector<8x128xf32>
      %c0_7 = arith.constant 0 : index
      %c0_8 = arith.constant 0 : index
      %17 = vector.load %arg4[%c0_7, %c0_8] : memref<8x128xf32, #tpu.memory_space<vmem>>, vector<8x128xf32>
      %18 = arith.subf %16, %17 : vector<8x128xf32>
      %19 = arith.mulf %18, %18 : vector<8x128xf32>
      %cst = arith.constant dense<0.000000e+00> : vector<128xf32>
      %20 = vector.multi_reduction <add>, %19, %cst [0] : vector<8x128xf32> to vector<128xf32>
      %21 = vector.shape_cast %20 : vector<128xf32> to vector<1x128xf32>
      %22 = vector.shape_cast %21 : vector<1x128xf32> to vector<1x1x128xf32>
      %c0_9 = arith.constant 0 : index
      %c0_10 = arith.constant 0 : index
      %c0_11 = arith.constant 0 : index
      %23 = vector.load %arg9[%c0_9, %c0_10, %c0_11] : memref<1x1x128xf32, #tpu.memory_space<vmem>>, vector<1x1x128xf32>
      tpu.vector_store %arg9[%c0_9, %c0_10, %c0_11], %22 {strides = array<i32>} : memref<1x1x128xf32, #tpu.memory_space<vmem>>, vector<1x1x128xf32>,
    } else {
    }
    %c2_i32_2 = arith.constant 2 : i32
    %8 = arith.cmpi sge, %arg0, %c2_i32_2 : i32
    %c3_i32 = arith.constant 3 : i32
    %9 = arith.cmpi slt, %arg0, %c3_i32 : i32
    %10 = arith.andi %8, %9 : i1
    %11 = arith.extui %10 : i1 to i32
    %c0_i32_3 = arith.constant 0 : i32
    %12 = arith.cmpi ne, %11, %c0_i32_3 : i32
    scf.if %12 {
      %c0 = arith.constant 0 : index
      %c0_6 = arith.constant 0 : index
      %16 = vector.load %arg5[%c0, %c0_6] : memref<8x128xf32, #tpu.memory_space<vmem>>, vector<8x128xf32>
      %c0_7 = arith.constant 0 : index
      %c0_8 = arith.constant 0 : index
      %17 = vector.load %arg6[%c0_7, %c0_8] : memref<8x128xf32, #tpu.memory_space<vmem>>, vector<8x128xf32>
      %18 = math.log %16 : vector<8x128xf32>
      %cst = arith.constant -1.000000e+02 : f32
      %19 = vector.broadcast %cst : f32 to vector<8x128xf32>
      %20 = arith.maximumf %18, %19 : vector<8x128xf32>
      %cst_9 = arith.constant 1.000000e+00 : f32
      %21 = vector.broadcast %cst_9 : f32 to vector<8x128xf32>
      %22 = arith.subf %21, %16 : vector<8x128xf32>
      %23 = math.log %22 : vector<8x128xf32>
      %cst_10 = arith.constant -1.000000e+02 : f32
      %24 = vector.broadcast %cst_10 : f32 to vector<8x128xf32>
      %25 = arith.maximumf %23, %24 : vector<8x128xf32>
      %26 = arith.mulf %17, %20 : vector<8x128xf32>
      %cst_11 = arith.constant 1.000000e+00 : f32
      %27 = vector.broadcast %cst_11 : f32 to vector<8x128xf32>
      %28 = arith.subf %27, %17 : vector<8x128xf32>
      %29 = arith.mulf %28, %25 : vector<8x128xf32>
      %30 = arith.addf %26, %29 : vector<8x128xf32>
      %cst_12 = arith.constant 0.000000e+00 : f32
      %31 = vector.broadcast %cst_12 : f32 to vector<8x128xf32>
      %32 = arith.subf %31, %30 : vector<8x128xf32>
      %cst_13 = arith.constant dense<0.000000e+00> : vector<128xf32>
      %33 = vector.multi_reduction <add>, %32, %cst_13 [0] : vector<8x128xf32> to vector<128xf32>
      %34 = vector.shape_cast %33 : vector<128xf32> to vector<1x128xf32>
      %35 = vector.shape_cast %34 : vector<1x128xf32> to vector<1x1x128xf32>
      %c0_14 = arith.constant 0 : index
      %c0_15 = arith.constant 0 : index
      %c0_16 = arith.constant 0 : index
      %36 = vector.load %arg9[%c0_14, %c0_15, %c0_16] : memref<1x1x128xf32, #tpu.memory_space<vmem>>, vector<1x1x128xf32>
      tpu.vector_store %arg9[%c0_14, %c0_15, %c0_16], %35 {strides = array<i32>} : memref<1x1x128xf32, #tpu.memory_space<vmem>>, vector<1x1x128xf32>,
    } else {
    }
    %c3_i32_4 = arith.constant 3 : i32
    %13 = arith.cmpi eq, %arg0, %c3_i32_4 : i32
    %14 = arith.extui %13 : i1 to i32
    %c0_i32_5 = arith.constant 0 : i32
    %15 = arith.cmpi ne, %14, %c0_i32_5 : i32
    scf.if %15 {
      %c0 = arith.constant 0 : index
      %c0_6 = arith.constant 0 : index
      %16 = vector.load %arg7[%c0, %c0_6] : memref<8x8xf32, #tpu.memory_space<vmem>>, vector<8x8xf32>
      %cst = arith.constant dense<0xFF800000> : vector<8xf32>
      %17 = vector.multi_reduction <maximumf>, %16, %cst [1] : vector<8x8xf32> to vector<8xf32>
      %18 = vector.shape_cast %17 : vector<8xf32> to vector<8x1xf32>
      %19 = vector.broadcast %18 : vector<8x1xf32> to vector<8x8xf32>
      %20 = arith.subf %16, %19 : vector<8x8xf32>
      %21 = math.exp %20 : vector<8x8xf32>
      %cst_7 = arith.constant dense<0.000000e+00> : vector<8xf32>
      %22 = vector.multi_reduction <add>, %21, %cst_7 [1] : vector<8x8xf32> to vector<8xf32>
      %23 = vector.shape_cast %22 : vector<8xf32> to vector<8x1xf32>
      %24 = math.log %23 : vector<8x1xf32>
      %25 = arith.addf %18, %24 : vector<8x1xf32>
      %26 = tpu.iota {dimensions = array<i32: 1>} : vector<8x8xi32>
      %c0_8 = arith.constant 0 : index
      %c0_9 = arith.constant 0 : index
      %27 = vector.load %arg8[%c0_8, %c0_9] : memref<8x1xi32, #tpu.memory_space<vmem>>, vector<8x1xi32>
      %28 = vector.broadcast %27 : vector<8x1xi32> to vector<8x8xi32>
      %29 = arith.cmpi eq, %26, %28 : vector<8x8xi32>
      %cst_10 = arith.constant 0.000000e+00 : f32
      %30 = vector.broadcast %cst_10 : f32 to vector<8x8xf32>
      %31 = arith.select %29, %16, %30 : vector<8x8xi1>, vector<8x8xf32>
      %cst_11 = arith.constant dense<0.000000e+00> : vector<8xf32>
      %32 = vector.multi_reduction <add>, %31, %cst_11 [1] : vector<8x8xf32> to vector<8xf32>
      %33 = vector.shape_cast %32 : vector<8xf32> to vector<8x1xf32>
      %34 = arith.subf %25, %33 : vector<8x1xf32>
      %35 = vector.shape_cast %34 : vector<8x1xf32> to vector<1x8x1xf32>
      %cst_12 = arith.constant dense<0.000000e+00> : vector<1xf32>
      %36 = vector.multi_reduction <add>, %35, %cst_12 [1, 2] : vector<1x8x1xf32> to vector<1xf32>
      %37 = vector.shape_cast %36 : vector<1xf32> to vector<1x1x1xf32>
      %38 = vector.extract %37[0, 0, 0] : f32 from vector<1x1x1xf32>
      %39 = tpu.iota {dimensions = array<i32: 2>} : vector<1x1x128xi32>
      %c0_i32_13 = arith.constant 0 : i32
      %40 = vector.broadcast %c0_i32_13 : i32 to vector<1x1x128xi32>
      %41 = arith.cmpi eq, %39, %40 : vector<1x1x128xi32>
      %cst_14 = arith.constant 0.000000e+00 : f32
      %42 = vector.broadcast %38 : f32 to vector<1x1x128xf32>
      %43 = vector.broadcast %cst_14 : f32 to vector<1x1x128xf32>
      %44 = arith.select %41, %42, %43 : vector<1x1x128xi1>, vector<1x1x128xf32>
      %c0_15 = arith.constant 0 : index
      %c0_16 = arith.constant 0 : index
      %c0_17 = arith.constant 0 : index
      %45 = vector.load %arg9[%c0_15, %c0_16, %c0_17] : memref<1x1x128xf32, #tpu.memory_space<vmem>>, vector<1x1x128xf32>
      tpu.vector_store %arg9[%c0_15, %c0_16, %c0_17], %44 {strides = array<i32>} : memref<1x1x128xf32, #tpu.memory_space<vmem>>, vector<1x1x128xf32>,
    } else {
    }
    return
  }
  func.func @transform_0(%arg0: i32) -> (i32, i32) {
    %c0_i32 = arith.constant 0 : i32
    %0 = arith.subi %arg0, %c0_i32 : i32
    %c0_i32_0 = arith.constant 0 : i32
    %1 = arith.maxsi %0, %c0_i32_0 : i32
    %c0_i32_1 = arith.constant 0 : i32
    %2 = arith.minsi %1, %c0_i32_1 : i32
    %c0_i32_2 = arith.constant 0 : i32
    %c0_i32_3 = arith.constant 0 : i32
    return %2, %c0_i32_2 : i32, i32
  }
  func.func @transform_1(%arg0: i32) -> (i32, i32) {
    %c0_i32 = arith.constant 0 : i32
    %0 = arith.subi %arg0, %c0_i32 : i32
    %c0_i32_0 = arith.constant 0 : i32
    %1 = arith.maxsi %0, %c0_i32_0 : i32
    %c0_i32_1 = arith.constant 0 : i32
    %2 = arith.minsi %1, %c0_i32_1 : i32
    %c0_i32_2 = arith.constant 0 : i32
    %c0_i32_3 = arith.constant 0 : i32
    return %2, %c0_i32_2 : i32, i32
  }
  func.func @transform_2(%arg0: i32) -> (i32, i32) {
    %c1_i32 = arith.constant 1 : i32
    %0 = arith.subi %arg0, %c1_i32 : i32
    %c0_i32 = arith.constant 0 : i32
    %1 = arith.maxsi %0, %c0_i32 : i32
    %c0_i32_0 = arith.constant 0 : i32
    %2 = arith.minsi %1, %c0_i32_0 : i32
    %c0_i32_1 = arith.constant 0 : i32
    %c0_i32_2 = arith.constant 0 : i32
    return %2, %c0_i32_1 : i32, i32
  }
  func.func @transform_3(%arg0: i32) -> (i32, i32) {
    %c1_i32 = arith.constant 1 : i32
    %0 = arith.subi %arg0, %c1_i32 : i32
    %c0_i32 = arith.constant 0 : i32
    %1 = arith.maxsi %0, %c0_i32 : i32
    %c0_i32_0 = arith.constant 0 : i32
    %2 = arith.minsi %1, %c0_i32_0 : i32
    %c0_i32_1 = arith.constant 0 : i32
    %c0_i32_2 = arith.constant 0 : i32
    return %2, %c0_i32_1 : i32, i32
  }
  func.func @transform_4(%arg0: i32) -> (i32, i32) {
    %c2_i32 = arith.constant 2 : i32
    %0 = arith.subi %arg0, %c2_i32 : i32
    %c0_i32 = arith.constant 0 : i32
    %1 = arith.maxsi %0, %c0_i32 : i32
    %c0_i32_0 = arith.constant 0 : i32
    %2 = arith.minsi %1, %c0_i32_0 : i32
    %c0_i32_1 = arith.constant 0 : i32
    %c0_i32_2 = arith.constant 0 : i32
    return %2, %c0_i32_1 : i32, i32
  }
  func.func @transform_5(%arg0: i32) -> (i32, i32) {
    %c2_i32 = arith.constant 2 : i32
    %0 = arith.subi %arg0, %c2_i32 : i32
    %c0_i32 = arith.constant 0 : i32
    %1 = arith.maxsi %0, %c0_i32 : i32
    %c0_i32_0 = arith.constant 0 : i32
    %2 = arith.minsi %1, %c0_i32_0 : i32
    %c0_i32_1 = arith.constant 0 : i32
    %c0_i32_2 = arith.constant 0 : i32
    return %2, %c0_i32_1 : i32, i32
  }
  func.func @transform_6(%arg0: i32) -> (i32, i32) {
    %c0_i32 = arith.constant 0 : i32
    %c0_i32_0 = arith.constant 0 : i32
    %c0_i32_1 = arith.constant 0 : i32
    return %c0_i32, %c0_i32_0 : i32, i32
  }
  func.func @transform_7(%arg0: i32) -> (i32, i32) {
    %c0_i32 = arith.constant 0 : i32
    %c0_i32_0 = arith.constant 0 : i32
    %c0_i32_1 = arith.constant 0 : i32
    return %c0_i32, %c0_i32_0 : i32, i32
  }
  func.func @transform_8(%arg0: i32) -> (i32, i32, i32) {
    %c0_i32 = arith.constant 0 : i32
    %c0_i32_0 = arith.constant 0 : i32
    %c0_i32_1 = arith.constant 0 : i32
    return %arg0, %c0_i32, %c0_i32_0 : i32, i32, i32
  }
}

</mosaic_0001>

<llo_original>
// kernel: custom_loss.1
$region0: #{custom_loss.1}
  #allocation0 [shape = 'u32[]', space=smem, size = 0x4, offset = 0x4, fixed_abs, tag = 'smem constant byte address 0x4 - core index']
  #allocation1 [shape = 'u32[72,128]{1,0:T(1,128)}', space=vmem, size = 0x9000, scoped, tag = 'internal scratch']
  %s0 = inlined_call_operand.vmem [shape: f32[8,128], index: 0, kind: input, shape index: {}]
  %s1 = inlined_call_operand.vmem [shape: f32[8,128], index: 1, kind: input, shape index: {}]
  %s2 = inlined_call_operand.vmem [shape: f32[8,128], index: 2, kind: input, shape index: {}]
  %s3 = inlined_call_operand.vmem [shape: f32[8,128], index: 3, kind: input, shape index: {}]
  %s4 = inlined_call_operand.vmem [shape: f32[8,128], index: 4, kind: input, shape index: {}]
  %s5 = inlined_call_operand.vmem [shape: f32[8,128], index: 5, kind: input, shape index: {}]
  %s6 = inlined_call_operand.vmem [shape: f32[8,8], index: 6, kind: input, shape index: {}]
  %s7 = inlined_call_operand.vmem [shape: s32[8,1], index: 7, kind: input, shape index: {}]
  %s8 = inlined_call_operand.vmem [shape: f32[4,1,128], index: 8, kind: output, shape index: {}]
  %s9 = sld [smem:[#allocation0]]
  $region81: #{custom_loss.1} parent=0
    _
  %s11 = ssub.s32 1, %s9
  %s12 = scalar_select 0, %s11, %s9
  loop: start=0, step=1, limit=6
  $region2: #{custom_loss.1} parent=0 // loop_pre_header
    _
  $region3: #{custom_loss.1} parent=0 // loop_header
    %s14 = sphi 0, %s18
    %p15 = scmp.ge.s32.totalorder %s14, 6
    %s32 = sphi 0, %s34
    %s35 = sphi 0, %s32
    %s36 = sphi 0, %s35
    %s52 = sphi 0, %s36
    %s66 = sphi 0, %s68
    %s69 = sphi 0, %s66
    %s70 = sphi 0, %s69
    %s86 = sphi 0, %s70
    %s102 = sphi 0, %s104
    %s105 = sphi 0, %s102
    %s106 = sphi 0, %s105
    %s122 = sphi 0, %s106
    %s138 = sphi 0, %s140
    %s141 = sphi 0, %s138
    %s142 = sphi 0, %s141
    %s158 = sphi 0, %s142
    %s174 = sphi 0, %s176
    %s177 = sphi 0, %s174
    %s178 = sphi 0, %s177
    %s194 = sphi 0, %s178
    %s210 = sphi 0, %s212
    %s213 = sphi 0, %s210
    %s214 = sphi 0, %s213
    %s230 = sphi 0, %s214
    %s234 = sphi 0, %s234
    %s236 = sphi 0, %s234
    %s237 = sphi 0, %s236
    %s251 = sphi 0, %s237
    %s255 = sphi 0, %s255
    %s257 = sphi 0, %s255
    %s258 = sphi 0, %s257
    %s272 = sphi 0, %s258
    %s278 = sphi 0, %s280
    %s281 = sphi 0, %s278
    %s282 = sphi 0, %s281
    %s298 = sphi 0, %s282
  $region4: #{custom_loss.1} parent=0 // loop_header_branch
    %17 = sbr.rel (%p15) target = $region8
  $region5: #{custom_loss.1} parent=0 // loop_body
    %s19 = ssub.s32 %s14, 1
    %s20 = ssub.s32 %s14, 2
    %s21 = sadd.s32 %s14, 1
    %p22 = scmp.gt.s32.totalorder %s14, 0
    %s23 = scalar_select %p22, %s14, 0
    %p24 = scmp.lt.s32.totalorder %s23, 0
    %s25 = scalar_select %p24, %s23, 0
    %p26 = scmp.gt.s32.totalorder %s21, 0
    %s27 = scalar_select %p26, %s21, 0
    %p28 = scmp.lt.s32.totalorder %s27, 0
    %s29 = scalar_select %p28, %s27, 0
    %s30 = ssub.s32 %s25, %s29
    %p31 = scmp.eq.s32.totalorder %s30, 0
    %s33 = sadd.s32 %s32, 1
    %s34 = scalar_select %p31, %s32, %s33
    %p37 = pneg %p31
    %p38 = scmp.eq.s32.totalorder %s14, 3
    %p39 = por %p37, %p38
    %p40 = scmp.ne.s32.totalorder %s32, %s35
    %p41 = scmp.eq.s32.totalorder %s14, 0
    %p42 = por %p40, %p41
    %p43 = scmp.ne.s32.totalorder %s32, %s35
    %p44 = scmp.eq.s32.totalorder %s19, 3
    %p45 = por %p43, %p44
    %p46 = scmp.ne.s32.totalorder %s35, %s36
    %p47 = scmp.eq.s32.totalorder %s19, 0
    %p48 = por %p46, %p47
    %p49 = scmp.ne.s32.totalorder %s35, %s36
    %p50 = scmp.eq.s32.totalorder %s20, 3
    %p51 = por %p49, %p50
    %p53 = scmp.ne.s32.totalorder %s36, %s52
    %p54 = scmp.eq.s32.totalorder %s20, 0
    %p55 = por %p53, %p54
    %p56 = scmp.gt.s32.totalorder %s14, 0
    %s57 = scalar_select %p56, %s14, 0
    %p58 = scmp.lt.s32.totalorder %s57, 0
    %s59 = scalar_select %p58, %s57, 0
    %p60 = scmp.gt.s32.totalorder %s21, 0
    %s61 = scalar_select %p60, %s21, 0
    %p62 = scmp.lt.s32.totalorder %s61, 0
    %s63 = scalar_select %p62, %s61, 0
    %s64 = ssub.s32 %s59, %s63
    %p65 = scmp.eq.s32.totalorder %s64, 0
    %s67 = sadd.s32 %s66, 1
    %s68 = scalar_select %p65, %s66, %s67
    %p71 = pneg %p65
    %p72 = scmp.eq.s32.totalorder %s14, 3
    %p73 = por %p71, %p72
    %p74 = scmp.ne.s32.totalorder %s66, %s69
    %p75 = scmp.eq.s32.totalorder %s14, 0
    %p76 = por %p74, %p75
    %p77 = scmp.ne.s32.totalorder %s66, %s69
    %p78 = scmp.eq.s32.totalorder %s19, 3
    %p79 = por %p77, %p78
    %p80 = scmp.ne.s32.totalorder %s69, %s70
    %p81 = scmp.eq.s32.totalorder %s19, 0
    %p82 = por %p80, %p81
    %p83 = scmp.ne.s32.totalorder %s69, %s70
    %p84 = scmp.eq.s32.totalorder %s20, 3
    %p85 = por %p83, %p84
    %p87 = scmp.ne.s32.totalorder %s70, %s86
    %p88 = scmp.eq.s32.totalorder %s20, 0
    %p89 = por %p87, %p88
    %s90 = ssub.s32 %s14, 1
    %p91 = scmp.gt.s32.totalorder %s90, 0
    %s92 = scalar_select %p91, %s90, 0
    %p93 = scmp.lt.s32.totalorder %s92, 0
    %s94 = scalar_select %p93, %s92, 0
    %s95 = ssub.s32 %s21, 1
    %p96 = scmp.gt.s32.totalorder %s95, 0
    %s97 = scalar_select %p96, %s95, 0
    %p98 = scmp.lt.s32.totalorder %s97, 0
    %s99 = scalar_select %p98, %s97, 0
    %s100 = ssub.s32 %s94, %s99
    %p101 = scmp.eq.s32.totalorder %s100, 0
    %s103 = sadd.s32 %s102, 1
    %s104 = scalar_select %p101, %s102, %s103
    %p107 = pneg %p101
    %p108 = scmp.eq.s32.totalorder %s14, 3
    %p109 = por %p107, %p108
    %p110 = scmp.ne.s32.totalorder %s102, %s105
    %p111 = scmp.eq.s32.totalorder %s14, 0
    %p112 = por %p110, %p111
    %p113 = scmp.ne.s32.totalorder %s102, %s105
    %p114 = scmp.eq.s32.totalorder %s19, 3
    %p115 = por %p113, %p114
    %p116 = scmp.ne.s32.totalorder %s105, %s106
    %p117 = scmp.eq.s32.totalorder %s19, 0
    %p118 = por %p116, %p117
    %p119 = scmp.ne.s32.totalorder %s105, %s106
    %p120 = scmp.eq.s32.totalorder %s20, 3
    %p121 = por %p119, %p120
    %p123 = scmp.ne.s32.totalorder %s106, %s122
    %p124 = scmp.eq.s32.totalorder %s20, 0
    %p125 = por %p123, %p124
    %s126 = ssub.s32 %s14, 1
    %p127 = scmp.gt.s32.totalorder %s126, 0
    %s128 = scalar_select %p127, %s126, 0
    %p129 = scmp.lt.s32.totalorder %s128, 0
    %s130 = scalar_select %p129, %s128, 0
    %s131 = ssub.s32 %s21, 1
    %p132 = scmp.gt.s32.totalorder %s131, 0
    %s133 = scalar_select %p132, %s131, 0
    %p134 = scmp.lt.s32.totalorder %s133, 0
    %s135 = scalar_select %p134, %s133, 0
    %s136 = ssub.s32 %s130, %s135
    %p137 = scmp.eq.s32.totalorder %s136, 0
    %s139 = sadd.s32 %s138, 1
    %s140 = scalar_select %p137, %s138, %s139
    %p143 = pneg %p137
    %p144 = scmp.eq.s32.totalorder %s14, 3
    %p145 = por %p143, %p144
    %p146 = scmp.ne.s32.totalorder %s138, %s141
    %p147 = scmp.eq.s32.totalorder %s14, 0
    %p148 = por %p146, %p147
    %p149 = scmp.ne.s32.totalorder %s138, %s141
    %p150 = scmp.eq.s32.totalorder %s19, 3
    %p151 = por %p149, %p150
    %p152 = scmp.ne.s32.totalorder %s141, %s142
    %p153 = scmp.eq.s32.totalorder %s19, 0
    %p154 = por %p152, %p153
    %p155 = scmp.ne.s32.totalorder %s141, %s142
    %p156 = scmp.eq.s32.totalorder %s20, 3
    %p157 = por %p155, %p156
    %p159 = scmp.ne.s32.totalorder %s142, %s158
    %p160 = scmp.eq.s32.totalorder %s20, 0
    %p161 = por %p159, %p160
    %s162 = ssub.s32 %s14, 2
    %p163 = scmp.gt.s32.totalorder %s162, 0
    %s164 = scalar_select %p163, %s162, 0
    %p165 = scmp.lt.s32.totalorder %s164, 0
    %s166 = scalar_select %p165, %s164, 0
    %s167 = ssub.s32 %s21, 2
    %p168 = scmp.gt.s32.totalorder %s167, 0
    %s169 = scalar_select %p168, %s167, 0
    %p170 = scmp.lt.s32.totalorder %s169, 0
    %s171 = scalar_select %p170, %s169, 0
    %s172 = ssub.s32 %s166, %s171
    %p173 = scmp.eq.s32.totalorder %s172, 0
    %s175 = sadd.s32 %s174, 1
    %s176 = scalar_select %p173, %s174, %s175
    %p179 = pneg %p173
    %p180 = scmp.eq.s32.totalorder %s14, 3
    %p181 = por %p179, %p180
    %p182 = scmp.ne.s32.totalorder %s174, %s177
    %p183 = scmp.eq.s32.totalorder %s14, 0
    %p184 = por %p182, %p183
    %p185 = scmp.ne.s32.totalorder %s174, %s177
    %p186 = scmp.eq.s32.totalorder %s19, 3
    %p187 = por %p185, %p186
    %p188 = scmp.ne.s32.totalorder %s177, %s178
    %p189 = scmp.eq.s32.totalorder %s19, 0
    %p190 = por %p188, %p189
    %p191 = scmp.ne.s32.totalorder %s177, %s178
    %p192 = scmp.eq.s32.totalorder %s20, 3
    %p193 = por %p191, %p192
    %p195 = scmp.ne.s32.totalorder %s178, %s194
    %p196 = scmp.eq.s32.totalorder %s20, 0
    %p197 = por %p195, %p196
    %s198 = ssub.s32 %s14, 2
    %p199 = scmp.gt.s32.totalorder %s198, 0
    %s200 = scalar_select %p199, %s198, 0
    %p201 = scmp.lt.s32.totalorder %s200, 0
    %s202 = scalar_select %p201, %s200, 0
    %s203 = ssub.s32 %s21, 2
    %p204 = scmp.gt.s32.totalorder %s203, 0
    %s205 = scalar_select %p204, %s203, 0
    %p206 = scmp.lt.s32.totalorder %s205, 0
    %s207 = scalar_select %p206, %s205, 0
    %s208 = ssub.s32 %s202, %s207
    %p209 = scmp.eq.s32.totalorder %s208, 0
    %s211 = sadd.s32 %s210, 1
    %s212 = scalar_select %p209, %s210, %s211
    %p215 = pneg %p209
    %p216 = scmp.eq.s32.totalorder %s14, 3
    %p217 = por %p215, %p216
    %p218 = scmp.ne.s32.totalorder %s210, %s213
    %p219 = scmp.eq.s32.totalorder %s14, 0
    %p220 = por %p218, %p219
    %p221 = scmp.ne.s32.totalorder %s210, %s213
    %p222 = scmp.eq.s32.totalorder %s19, 3
    %p223 = por %p221, %p222
    %p224 = scmp.ne.s32.totalorder %s213, %s214
    %p225 = scmp.eq.s32.totalorder %s19, 0
    %p226 = por %p224, %p225
    %p227 = scmp.ne.s32.totalorder %s213, %s214
    %p228 = scmp.eq.s32.totalorder %s20, 3
    %p229 = por %p227, %p228
    %p231 = scmp.ne.s32.totalorder %s214, %s230
    %p232 = scmp.eq.s32.totalorder %s20, 0
    %p233 = por %p231, %p232
    %s235 = sadd.s32 %s234, 1
    %p238 = scmp.eq.s32.totalorder %s14, 3
    %p239 = scmp.ne.s32.totalorder %s234, %s236
    %p240 = scmp.eq.s32.totalorder %s14, 0
    %p241 = por %p239, %p240
    %p242 = scmp.ne.s32.totalorder %s234, %s236
    %p243 = scmp.eq.s32.totalorder %s19, 3
    %p244 = por %p242, %p243
    %p245 = scmp.ne.s32.totalorder %s236, %s237
    %p246 = scmp.eq.s32.totalorder %s19, 0
    %p247 = por %p245, %p246
    %p248 = scmp.ne.s32.totalorder %s236, %s237
    %p249 = scmp.eq.s32.totalorder %s20, 3
    %p250 = por %p248, %p249
    %p252 = scmp.ne.s32.totalorder %s237, %s251
    %p253 = scmp.eq.s32.totalorder %s20, 0
    %p254 = por %p252, %p253
    %s256 = sadd.s32 %s255, 1
    %p259 = scmp.eq.s32.totalorder %s14, 3
    %p260 = scmp.ne.s32.totalorder %s255, %s257
    %p261 = scmp.eq.s32.totalorder %s14, 0
    %p262 = por %p260, %p261
    %p263 = scmp.ne.s32.totalorder %s255, %s257
    %p264 = scmp.eq.s32.totalorder %s19, 3
    %p265 = por %p263, %p264
    %p266 = scmp.ne.s32.totalorder %s257, %s258
    %p267 = scmp.eq.s32.totalorder %s19, 0
    %p268 = por %p266, %p267
    %p269 = scmp.ne.s32.totalorder %s257, %s258
    %p270 = scmp.eq.s32.totalorder %s20, 3
    %p271 = por %p269, %p270
    %p273 = scmp.ne.s32.totalorder %s258, %s272
    %p274 = scmp.eq.s32.totalorder %s20, 0
    %p275 = por %p273, %p274
    %s276 = ssub.s32 %s14, %s21
    %p277 = scmp.eq.s32.totalorder %s276, 0
    %s279 = sadd.s32 %s278, 1
    %s280 = scalar_select %p277, %s278, %s279
    %p283 = pneg %p277
    %p284 = scmp.eq.s32.totalorder %s14, 3
    %p285 = por %p283, %p284
    %p286 = scmp.ne.s32.totalorder %s278, %s281
    %p287 = scmp.eq.s32.totalorder %s14, 0
    %p288 = por %p286, %p287
    %p289 = scmp.ne.s32.totalorder %s278, %s281
    %p290 = scmp.eq.s32.totalorder %s19, 3
    %p291 = por %p289, %p290
    %p292 = scmp.ne.s32.totalorder %s281, %s282
    %p293 = scmp.eq.s32.totalorder %s19, 0
    %p294 = por %p292, %p293
    %p295 = scmp.ne.s32.totalorder %s281, %s282
    %p296 = scmp.eq.s32.totalorder %s20, 3
    %p297 = por %p295, %p296
    %p299 = scmp.ne.s32.totalorder %s282, %s298
    %p300 = scmp.eq.s32.totalorder %s20, 0
    %p301 = por %p299, %p300
    %p302 = scmp.le.s32.totalorder 1, %s14
    %p303 = scmp.lt.s32.totalorder %s14, 5
    %p304 = pnand %p302, %p303
    %p305 = pneg %p304
    // Predicated region
    $region9: #{custom_loss.1} parent=5 // pred_check
      _
    $region10: #{custom_loss.1} parent=5 // pred_check_branch
      %307 = sbr.rel (%p304) target = $region12
    $region11: #{custom_loss.1} parent=5 // pred_region
      %s308 = ssub.s32 %s14, 1
      // Predicated region
      $region13: #{custom_loss.1} parent=11 // pred_check
        %p309 = pneg %p247
      $region14: #{custom_loss.1} parent=11 // pred_check_branch
        %311 = sbr.rel (%p309) target = $region16
      $region15: #{custom_loss.1} parent=11 // pred_region
        _
      $region16: #{custom_loss.1} parent=11 // pred_fallthru
        _
      // Predicated region
      $region17: #{custom_loss.1} parent=11 // pred_check
        %p312 = pneg %p268
      $region18: #{custom_loss.1} parent=11 // pred_check_branch
        %314 = sbr.rel (%p312) target = $region20
      $region19: #{custom_loss.1} parent=11 // pred_region
        _
      $region20: #{custom_loss.1} parent=11 // pred_fallthru
        _
    $region12: #{custom_loss.1} parent=5 // pred_fallthru
      _
    %p315 = scmp.lt.s32.totalorder %s14, 4
    // Predicated region
    $region21: #{custom_loss.1} parent=5 // pred_check
      %p316 = pneg %p315
    $region22: #{custom_loss.1} parent=5 // pred_check_branch
      %318 = sbr.rel (%p316) target = $region24
    $region23: #{custom_loss.1} parent=5 // pred_region
      // Predicated region
      $region25: #{custom_loss.1} parent=23 // pred_check
        %p319 = pneg %p42
      $region26: #{custom_loss.1} parent=23 // pred_check_branch
        %321 = sbr.rel (%p319) target = $region28
      $region27: #{custom_loss.1} parent=23 // pred_region
        %p322 = scmp.gt.s32.totalorder %s14, 0
        %s323 = scalar_select %p322, %s14, 0
        %p324 = scmp.lt.s32.totalorder %s323, 0
        %s325 = scalar_select %p324, %s323, 0
        %p326 = scmp.lt.s32.totalorder %s325, 0
        %s327 = scalar_select %p326, %s325, 0
        %s328 = smul.addr %s327, 8
        %s329 = scalar_lea.vmem %s0, %s328
        %p330 = scmp.gt.s32.totalorder %s14, 0
        %s331 = scalar_select %p330, %s14, 0
        %p332 = scmp.lt.s32.totalorder %s331, 0
        %s333 = scalar_select %p332, %s331, 0
      $region28: #{custom_loss.1} parent=23 // pred_fallthru
        _
      // Predicated region
      $region29: #{custom_loss.1} parent=23 // pred_check
        %p334 = pneg %p76
      $region30: #{custom_loss.1} parent=23 // pred_check_branch
        %336 = sbr.rel (%p334) target = $region32
      $region31: #{custom_loss.1} parent=23 // pred_region
        %p337 = scmp.gt.s32.totalorder %s14, 0
        %s338 = scalar_select %p337, %s14, 0
        %p339 = scmp.lt.s32.totalorder %s338, 0
        %s340 = scalar_select %p339, %s338, 0
        %p341 = scmp.lt.s32.totalorder %s340, 0
        %s342 = scalar_select %p341, %s340, 0
        %s343 = smul.addr %s342, 8
        %s344 = scalar_lea.vmem %s1, %s343
        %p345 = scmp.gt.s32.totalorder %s14, 0
        %s346 = scalar_select %p345, %s14, 0
        %p347 = scmp.lt.s32.totalorder %s346, 0
        %s348 = scalar_select %p347, %s346, 0
      $region32: #{custom_loss.1} parent=23 // pred_fallthru
        _
      // Predicated region
      $region33: #{custom_loss.1} parent=23 // pred_check
        %p349 = pneg %p112
      $region34: #{custom_loss.1} parent=23 // pred_check_branch
        %351 = sbr.rel (%p349) target = $region36
      $region35: #{custom_loss.1} parent=23 // pred_region
        %s352 = ssub.s32 %s14, 1
        %p353 = scmp.gt.s32.totalorder %s352, 0
        %s354 = scalar_select %p353, %s352, 0
        %p355 = scmp.lt.s32.totalorder %s354, 0
        %s356 = scalar_select %p355, %s354, 0
        %p357 = scmp.lt.s32.totalorder %s356, 0
        %s358 = scalar_select %p357, %s356, 0
        %s359 = smul.addr %s358, 8
        %s360 = scalar_lea.vmem %s2, %s359
        %s361 = ssub.s32 %s14, 1
        %p362 = scmp.gt.s32.totalorder %s361, 0
        %s363 = scalar_select %p362, %s361, 0
        %p364 = scmp.lt.s32.totalorder %s363, 0
        %s365 = scalar_select %p364, %s363, 0
      $region36: #{custom_loss.1} parent=23 // pred_fallthru
        _
      // Predicated region
      $region37: #{custom_loss.1} parent=23 // pred_check
        %p366 = pneg %p148
      $region38: #{custom_loss.1} parent=23 // pred_check_branch
        %368 = sbr.rel (%p366) target = $region40
      $region39: #{custom_loss.1} parent=23 // pred_region
        %s369 = ssub.s32 %s14, 1
        %p370 = scmp.gt.s32.totalorder %s369, 0
        %s371 = scalar_select %p370, %s369, 0
        %p372 = scmp.lt.s32.totalorder %s371, 0
        %s373 = scalar_select %p372, %s371, 0
        %p374 = scmp.lt.s32.totalorder %s373, 0
        %s375 = scalar_select %p374, %s373, 0
        %s376 = smul.addr %s375, 8
        %s377 = scalar_lea.vmem %s3, %s376
        %s378 = ssub.s32 %s14, 1
        %p379 = scmp.gt.s32.totalorder %s378, 0
        %s380 = scalar_select %p379, %s378, 0
        %p381 = scmp.lt.s32.totalorder %s380, 0
        %s382 = scalar_select %p381, %s380, 0
      $region40: #{custom_loss.1} parent=23 // pred_fallthru
        _
      // Predicated region
      $region41: #{custom_loss.1} parent=23 // pred_check
        %p383 = pneg %p184
      $region42: #{custom_loss.1} parent=23 // pred_check_branch
        %385 = sbr.rel (%p383) target = $region44
      $region43: #{custom_loss.1} parent=23 // pred_region
        %s386 = ssub.s32 %s14, 2
        %p387 = scmp.gt.s32.totalorder %s386, 0
        %s388 = scalar_select %p387, %s386, 0
        %p389 = scmp.lt.s32.totalorder %s388, 0
        %s390 = scalar_select %p389, %s388, 0
        %p391 = scmp.lt.s32.totalorder %s390, 0
        %s392 = scalar_select %p391, %s390, 0
        %s393 = smul.addr %s392, 8
        %s394 = scalar_lea.vmem %s4, %s393
        %s395 = ssub.s32 %s14, 2
        %p396 = scmp.gt.s32.totalorder %s395, 0
        %s397 = scalar_select %p396, %s395, 0
        %p398 = scmp.lt.s32.totalorder %s397, 0
        %s399 = scalar_select %p398, %s397, 0
      $region44: #{custom_loss.1} parent=23 // pred_fallthru
        _
      // Predicated region
      $region45: #{custom_loss.1} parent=23 // pred_check
        %p400 = pneg %p220
      $region46: #{custom_loss.1} parent=23 // pred_check_branch
        %402 = sbr.rel (%p400) target = $region48
      $region47: #{custom_loss.1} parent=23 // pred_region
        %s403 = ssub.s32 %s14, 2
        %p404 = scmp.gt.s32.totalorder %s403, 0
        %s405 = scalar_select %p404, %s403, 0
        %p406 = scmp.lt.s32.totalorder %s405, 0
        %s407 = scalar_select %p406, %s405, 0
        %p408 = scmp.lt.s32.totalorder %s407, 0
        %s409 = scalar_select %p408, %s407, 0
        %s410 = smul.addr %s409, 8
        %s411 = scalar_lea.vmem %s5, %s410
        %s412 = ssub.s32 %s14, 2
        %p413 = scmp.gt.s32.totalorder %s412, 0
        %s414 = scalar_select %p413, %s412, 0
        %p415 = scmp.lt.s32.totalorder %s414, 0
        %s416 = scalar_select %p415, %s414, 0
      $region48: #{custom_loss.1} parent=23 // pred_fallthru
        _
    $region24: #{custom_loss.1} parent=5 // pred_fallthru
      _
    %p417 = scmp.le.s32.totalorder 1, %s14
    %p418 = scmp.lt.s32.totalorder %s14, 5
    %p419 = pnand %p417, %p418
    %p420 = pneg %p419
    // Predicated region
    $region49: #{custom_loss.1} parent=5 // pred_check
      _
    $region50: #{custom_loss.1} parent=5 // pred_check_branch
      %422 = sbr.rel (%p419) target = $region52
    $region51: #{custom_loss.1} parent=5 // pred_region
      %s423 = ssub.s32 %s14, 1
      %p424 = scmp.gt.s32.totalorder %s19, 0
      %s425 = scalar_select %p424, %s19, 0
      %p426 = scmp.lt.s32.totalorder %s425, 0
      %s427 = scalar_select %p426, %s425, 0
      %p428 = scmp.lt.s32.totalorder %s427, 0
      %s429 = scalar_select %p428, %s427, 0
      %s430 = smul.addr %s429, 8
      %s431 = scalar_lea.vmem %s0, %s430
      %p432 = pneg %p48
      %p433 = pneg %p45
      %p434 = scmp.gt.s32.totalorder %s19, 0
      %s435 = scalar_select %p434, %s19, 0
      %p436 = scmp.lt.s32.totalorder %s435, 0
      %s437 = scalar_select %p436, %s435, 0
      %p438 = scmp.lt.s32.totalorder %s437, 0
      %s439 = scalar_select %p438, %s437, 0
      %s440 = smul.addr %s439, 8
      %s441 = scalar_lea.vmem %s1, %s440
      %p442 = pneg %p82
      %p443 = pneg %p79
      %s444 = ssub.s32 %s19, 1
      %p445 = scmp.gt.s32.totalorder %s444, 0
      %s446 = scalar_select %p445, %s444, 0
      %p447 = scmp.lt.s32.totalorder %s446, 0
      %s448 = scalar_select %p447, %s446, 0
      %p449 = scmp.lt.s32.totalorder %s448, 0
      %s450 = scalar_select %p449, %s448, 0
      %s451 = smul.addr %s450, 8
      %s452 = scalar_lea.vmem %s2, %s451
      %p453 = pneg %p118
      %p454 = pneg %p115
      %s455 = ssub.s32 %s19, 1
      %p456 = scmp.gt.s32.totalorder %s455, 0
      %s457 = scalar_select %p456, %s455, 0
      %p458 = scmp.lt.s32.totalorder %s457, 0
      %s459 = scalar_select %p458, %s457, 0
      %p460 = scmp.lt.s32.totalorder %s459, 0
      %s461 = scalar_select %p460, %s459, 0
      %s462 = smul.addr %s461, 8
      %s463 = scalar_lea.vmem %s3, %s462
      %p464 = pneg %p154
      %p465 = pneg %p151
      %s466 = ssub.s32 %s19, 2
      %p467 = scmp.gt.s32.totalorder %s466, 0
      %s468 = scalar_select %p467, %s466, 0
      %p469 = scmp.lt.s32.totalorder %s468, 0
      %s470 = scalar_select %p469, %s468, 0
      %p471 = scmp.lt.s32.totalorder %s470, 0
      %s472 = scalar_select %p471, %s470, 0
      %s473 = smul.addr %s472, 8
      %s474 = scalar_lea.vmem %s4, %s473
      %p475 = pneg %p190
      %p476 = pneg %p187
      %s477 = ssub.s32 %s19, 2
      %p478 = scmp.gt.s32.totalorder %s477, 0
      %s479 = scalar_select %p478, %s477, 0
      %p480 = scmp.lt.s32.totalorder %s479, 0
      %s481 = scalar_select %p480, %s479, 0
      %p482 = scmp.lt.s32.totalorder %s481, 0
      %s483 = scalar_select %p482, %s481, 0
      %s484 = smul.addr %s483, 8
      %s485 = scalar_lea.vmem %s5, %s484
      %p486 = pneg %p226
      %p487 = pneg %p223
      %p488 = pneg %p247
      %p489 = pneg %p244
      %p490 = pneg %p268
      %p491 = pneg %p265
      %p492 = pneg %p294
      %p493 = pneg %p291
      %p494 = scmp.lt.s32.totalorder %s19, 3
      %s495 = scalar_select %p494, %s19, 3
      %s496 = scalar_lea.vmem %s8, %s495
      %p497 = scmp.gt.s32.totalorder %s19, 0
      %s498 = scalar_select %p497, %s19, 0
      %p499 = scmp.lt.s32.totalorder %s498, 0
      %s500 = scalar_select %p499, %s498, 0
      %p501 = scmp.lt.s32.totalorder %s500, 0
      %s502 = scalar_select %p501, %s500, 0
      %s503 = smul.addr %s502, 8
      %s504 = scalar_lea.vmem %s0, %s503
      %p505 = scmp.gt.s32.totalorder %s19, 0
      %s506 = scalar_select %p505, %s19, 0
      %p507 = scmp.lt.s32.totalorder %s506, 0
      %s508 = scalar_select %p507, %s506, 0
      %p509 = scmp.gt.s32.totalorder %s19, 0
      %s510 = scalar_select %p509, %s19, 0
      %p511 = scmp.lt.s32.totalorder %s510, 0
      %s512 = scalar_select %p511, %s510, 0
      %p513 = scmp.lt.s32.totalorder %s512, 0
      %s514 = scalar_select %p513, %s512, 0
      %s515 = smul.addr %s514, 8
      %s516 = scalar_lea.vmem %s1, %s515
      %p517 = scmp.gt.s32.totalorder %s19, 0
      %s518 = scalar_select %p517, %s19, 0
      %p519 = scmp.lt.s32.totalorder %s518, 0
      %s520 = scalar_select %p519, %s518, 0
      %s521 = ssub.s32 %s19, 1
      %p522 = scmp.gt.s32.totalorder %s521, 0
      %s523 = scalar_select %p522, %s521, 0
      %p524 = scmp.lt.s32.totalorder %s523, 0
      %s525 = scalar_select %p524, %s523, 0
      %p526 = scmp.lt.s32.totalorder %s525, 0
      %s527 = scalar_select %p526, %s525, 0
      %s528 = smul.addr %s527, 8
      %s529 = scalar_lea.vmem %s2, %s528
      %s530 = ssub.s32 %s19, 1
      %p531 = scmp.gt.s32.totalorder %s530, 0
      %s532 = scalar_select %p531, %s530, 0
      %p533 = scmp.lt.s32.totalorder %s532, 0
      %s534 = scalar_select %p533, %s532, 0
      %s535 = ssub.s32 %s19, 1
      %p536 = scmp.gt.s32.totalorder %s535, 0
      %s537 = scalar_select %p536, %s535, 0
      %p538 = scmp.lt.s32.totalorder %s537, 0
      %s539 = scalar_select %p538, %s537, 0
      %p540 = scmp.lt.s32.totalorder %s539, 0
      %s541 = scalar_select %p540, %s539, 0
      %s542 = smul.addr %s541, 8
      %s543 = scalar_lea.vmem %s3, %s542
      %s544 = ssub.s32 %s19, 1
      %p545 = scmp.gt.s32.totalorder %s544, 0
      %s546 = scalar_select %p545, %s544, 0
      %p547 = scmp.lt.s32.totalorder %s546, 0
      %s548 = scalar_select %p547, %s546, 0
      %s549 = ssub.s32 %s19, 2
      %p550 = scmp.gt.s32.totalorder %s549, 0
      %s551 = scalar_select %p550, %s549, 0
      %p552 = scmp.lt.s32.totalorder %s551, 0
      %s553 = scalar_select %p552, %s551, 0
      %p554 = scmp.lt.s32.totalorder %s553, 0
      %s555 = scalar_select %p554, %s553, 0
      %s556 = smul.addr %s555, 8
      %s557 = scalar_lea.vmem %s4, %s556
      %s558 = ssub.s32 %s19, 2
      %p559 = scmp.gt.s32.totalorder %s558, 0
      %s560 = scalar_select %p559, %s558, 0
      %p561 = scmp.lt.s32.totalorder %s560, 0
      %s562 = scalar_select %p561, %s560, 0
      %s563 = ssub.s32 %s19, 2
      %p564 = scmp.gt.s32.totalorder %s563, 0
      %s565 = scalar_select %p564, %s563, 0
      %p566 = scmp.lt.s32.totalorder %s565, 0
      %s567 = scalar_select %p566, %s565, 0
      %p568 = scmp.lt.s32.totalorder %s567, 0
      %s569 = scalar_select %p568, %s567, 0
      %s570 = smul.addr %s569, 8
      %s571 = scalar_lea.vmem %s5, %s570
      %s572 = ssub.s32 %s19, 2
      %p573 = scmp.gt.s32.totalorder %s572, 0
      %s574 = scalar_select %p573, %s572, 0
      %p575 = scmp.lt.s32.totalorder %s574, 0
      %s576 = scalar_select %p575, %s574, 0
      %p577 = scmp.lt.s32.totalorder %s19, 3
      %s578 = scalar_select %p577, %s19, 3
      %s579 = scalar_lea.vmem %s8, %s578
      %p580 = scmp.lt.s32.totalorder %s19, 1
      // Predicated region
      $region53: #{custom_loss.1} parent=51 // pred_check
        %p581 = pneg %p580
      $region54: #{custom_loss.1} parent=51 // pred_check_branch
        %583 = sbr.rel (%p581) target = $region56
      $region55: #{custom_loss.1} parent=51 // pred_region
        %v584 = vld [vmem:[%s504] sm:$0xff]
        %v585 = vld [vmem:[%s516] sm:$0xff]
        %v586 = vsub.f32 %v584, %v585
        %v587 = vmul.f32 %v586, %v586
        %v588 = vrot.slane %v587, 4
        %v589 = vadd.f32 %v587, %v588
        %v590 = vrot.slane %v589, 2
        %v591 = vadd.f32 %v589, %v590
        %v592 = vrot.slane %v591, 1
        %v593 = vadd.f32 %v591, %v592
        %594 = vst [vmem:[%s579] sm:$0x1] %v593
      $region56: #{custom_loss.1} parent=51 // pred_fallthru
        _
      %p595 = scmp.ge.s32.totalorder %s19, 1
      %p596 = scmp.lt.s32.totalorder %s19, 2
      %p597 = pnand %p595, %p596
      %p598 = pneg %p597
      // Predicated region
      $region57: #{custom_loss.1} parent=51 // pred_check
        _
      $region58: #{custom_loss.1} parent=51 // pred_check_branch
        %600 = sbr.rel (%p597) target = $region60
      $region59: #{custom_loss.1} parent=51 // pred_region
        %v601 = vld [vmem:[%s529] sm:$0xff]
        %v602 = vld [vmem:[%s543] sm:$0xff]
        %v603 = vsub.f32 %v601, %v602
        %v604 = vmul.f32 %v603, %v603
        %v605 = vrot.slane %v604, 4
        %v606 = vadd.f32 %v604, %v605
        %v607 = vrot.slane %v606, 2
        %v608 = vadd.f32 %v606, %v607
        %v609 = vrot.slane %v608, 1
        %v610 = vadd.f32 %v608, %v609
        %611 = vst [vmem:[%s579] sm:$0x1] %v610
      $region60: #{custom_loss.1} parent=51 // pred_fallthru
        _
      %p612 = scmp.ge.s32.totalorder %s19, 2
      %p613 = scmp.lt.s32.totalorder %s19, 3
      %p614 = pnand %p612, %p613
      %p615 = pneg %p614
      // Predicated region
      $region61: #{custom_loss.1} parent=51 // pred_check
        _
      $region62: #{custom_loss.1} parent=51 // pred_check_branch
        %617 = sbr.rel (%p614) target = $region64
      $region63: #{custom_loss.1} parent=51 // pred_region
        %v618 = vld [vmem:[%s557] sm:$0xff]
        %v619 = vld [vmem:[%s571] sm:$0xff]
        %v620 = vlog2.pop %v618
        %v621 = vmul.f32 %v620, 0.6931472
        %v622 = vmax.f32 %v621, -100.0
        %v623 = vsub.f32 1.0, %v618
        %v624 = vlog2.pop %v623
        %v625 = vmul.f32 %v624, 0.6931472
        %v626 = vmax.f32 %v625, -100.0
        %v627 = vmul.f32 %v619, %v622
        %v628 = vsub.f32 1.0, %v619
        %v629 = vmul.f32 %v628, %v626
        %v630 = vadd.f32 %v627, %v629
        %v631 = vsub.f32 0.0, %v630
        %v632 = vrot.slane %v631, 4
        %v633 = vadd.f32 %v631, %v632
        %v634 = vrot.slane %v633, 2
        %v635 = vadd.f32 %v633, %v634
        %v636 = vrot.slane %v635, 1
        %v637 = vadd.f32 %v635, %v636
        %638 = vst [vmem:[%s579] sm:$0x1] %v637
      $region64: #{custom_loss.1} parent=51 // pred_fallthru
        _
      %p639 = scmp.eq.s32.totalorder %s19, 3
      // Predicated region
      $region65: #{custom_loss.1} parent=51 // pred_check
        %p640 = pneg %p639
      $region66: #{custom_loss.1} parent=51 // pred_check_branch
        %642 = sbr.rel (%p640) target = $region68
      $region67: #{custom_loss.1} parent=51 // pred_region
        %v643 = vld [vmem:[%s6] sm:$0xff]
        %vm644 = vcmask 64512
        %v645 = vsel %vm644, %v643, -inf
        %646 = vmax.xlane.f32.xlu0 %v645
        %v647 = vpop.xlane.xlu0 %646
        %v648 = vsub.f32 %v643, %v647
        %v649 = vmul.f32 %v648, 1.442695
        %v650 = vpow.pop %v649
        %v651 = vsel %vm644, %v650, 0.0
        %652 = vadd.xlane.f32.xlu0 %v651
        %v653 = vpop.xlane.xlu0 %652
        %v654 = vlog2.pop %v653
        %v655 = vmul.f32 %v654, 0.6931472
        %v656 = vadd.f32 %v647, %v655
        %v657 = vlaneseq
        %v658 = vand.u32 %v657, 127
        %v659 = vld [vmem:[%s7] sm:$0xff]
        %660 = vset.pattern.permute.xlu0 0
        %661 = vperm.xlu0 %660, %v659
        %v662 = vpop.permute.xlu0 %661
        %vm663 = vcmp.eq.s32.totalorder %v658, %v662
        %v664 = vsel %vm663, %v643, 0.0
        %v665 = vsel %vm644, %v664, 0.0
        %666 = vadd.xlane.f32.xlu0 %v665
        %v667 = vpop.xlane.xlu0 %666
        %v668 = vsub.f32 %v656, %v667
        %vm669 = vcmask 7168
        %v670 = vsel %vm669, %v668, 0.0
        %671 = vadd.xlane.f32.xlu0 %v670
        %v672 = vpop.xlane.xlu0 %671
        %v673 = vrot.slane %v672, 4
        %v674 = vadd.f32 %v672, %v673
        %v675 = vrot.slane %v674, 2
        %v676 = vadd.f32 %v674, %v675
        %v677 = vrot.slane %v676, 1
        %v678 = vadd.f32 %v676, %v677
        %s679 = vtos %v678
        %vm680 = vcmp.eq.s32.totalorder %v658, 0
        %v681 = vstv %s679
        %v682 = vsel %vm680, %v681, 0.0
        %683 = vst [vmem:[%s579] sm:$0x1] %v682
      $region68: #{custom_loss.1} parent=51 // pred_fallthru
        _
      %p684 = scmp.lt.s32.totalorder %s19, 3
      %s685 = scalar_select %p684, %s19, 3
      %s686 = scalar_lea.vmem %s8, %s685
      // Predicated region
      $region69: #{custom_loss.1} parent=51 // pred_check
        %p687 = pneg %p291
      $region70: #{custom_loss.1} parent=51 // pred_check_branch
        %689 = sbr.rel (%p687) target = $region72
      $region71: #{custom_loss.1} parent=51 // pred_region
        _
      $region72: #{custom_loss.1} parent=51 // pred_fallthru
        _
    $region52: #{custom_loss.1} parent=5 // pred_fallthru
      _
    %p690 = scmp.le.s32.totalorder 2, %s14
    // Predicated region
    $region73: #{custom_loss.1} parent=5 // pred_check
      %p691 = pneg %p690
    $region74: #{custom_loss.1} parent=5 // pred_check_branch
      %693 = sbr.rel (%p691) target = $region76
    $region75: #{custom_loss.1} parent=5 // pred_region
      %s694 = ssub.s32 %s14, 2
      // Predicated region
      $region77: #{custom_loss.1} parent=75 // pred_check
        %p695 = pneg %p297
      $region78: #{custom_loss.1} parent=75 // pred_check_branch
        %697 = sbr.rel (%p695) target = $region80
      $region79: #{custom_loss.1} parent=75 // pred_region
        %p698 = scmp.lt.s32.totalorder %s20, 3
        %s699 = scalar_select %p698, %s20, 3
        %s700 = scalar_lea.vmem %s8, %s699
      $region80: #{custom_loss.1} parent=75 // pred_fallthru
        _
    $region76: #{custom_loss.1} parent=5 // pred_fallthru
      _
  $region6: #{custom_loss.1} parent=0 // loop_footer
    %s18 = sadd.s32 1, %s14
  $region7: #{custom_loss.1} parent=0 // loop_footer_branch
    %13 = sbr.rel target = $region3
  $region8: #{custom_loss.1} parent=0 // loop_exit
    _

</llo_original>
